<compile_context>
chip_gen: v7x
topology: tpu7x:2x2x1
jax: 0.10.0
libtpu: 0.0.40
codegen_flags: <defaults>
</compile_context>

<pallas_src>
import functools

import jax
import jax.numpy as jnp
from jax import lax
from jax.experimental import pallas as pl
from jax.experimental.pallas import tpu as pltpu


def _round_up(v, m):
    return (v + m - 1) // m * m


def _full_spec(shape):
    return pl.BlockSpec(shape, lambda: tuple(0 for _ in shape))


def _smconv_kernel(a_ref, x_ref, w_ref, b_ref, o_ref, xs_ref, *, K, normalize, Fp):
    """Single-block SMConv; every operand resident in VMEM.

    a_ref : (Np, Np)        f32  dense adjacency (A[dst, src] = w)
    x_ref : (Np, Fp)        f32  node features (lane-padded)
    w_ref : ((K+1)*Fp, Hp)  bf16 stacked projection weights [W0; W1; ...; WK]
    b_ref : (1, Hp)         f32  bias (lane-padded)
    o_ref : (Np, Hp)        f32  output
    xs_ref: (Np, (K+1)*Fp)  bf16 scratch holding [x | Ax | A^2 x | ... | A^K x]
    """
    a_f32 = a_ref[...]
    x = x_ref[...]

    if normalize:
        # gcn_norm with add_self_loops=False: deg[i] = sum_j A[i, j]
        deg = jnp.sum(a_f32, axis=1, keepdims=True)                    # (Np, 1)
        dis = jnp.where(deg > 0, lax.rsqrt(deg), jnp.zeros_like(deg))  # deg^{-1/2}
        # Hoist the broadcast out of the hop loop (2 VPU muls/hop, no re-broadcast).
        dis_b = jnp.broadcast_to(dis, x.shape)                         # (Np, Fp)

    # bf16 MXU inputs, f32 accumulation.
    a = a_f32.astype(jnp.bfloat16)

    xs_ref[:, 0:Fp] = x.astype(jnp.bfloat16)
    xk = x
    for k in range(1, K + 1):
        if normalize:
            # (D^{-1/2} A D^{-1/2}) @ xk  ==  dis * (A @ (dis * xk))
            xk = dis_b * jnp.dot(a, (dis_b * xk).astype(jnp.bfloat16),
                                 preferred_element_type=jnp.float32)
        else:
            xk = jnp.dot(a, xk.astype(jnp.bfloat16),
                         preferred_element_type=jnp.float32)
        xs_ref[:, k * Fp:(k + 1) * Fp] = xk.astype(jnp.bfloat16)

    # One lane-dense projection: (Np, (K+1)*Fp) @ ((K+1)*Fp, Hp).
    out = jnp.dot(xs_ref[...], w_ref[...], preferred_element_type=jnp.float32)
    o_ref[...] = out + b_ref[...]


def smconv_pallas(A, x, W, bias, *, K, normalize):
    """A: (N, N) dense adjacency, x: (N, F), W: (K+1, F, H), bias: (1, H) -> (N, H)."""
    N, F = x.shape
    H = W.shape[-1]

    # Pad: nodes to the sublane quantum (8), feature / hidden dims to the lane
    # quantum (128) so matmuls and the output store are lane-dense.
    Np = _round_up(max(N, 8), 8)
    Fp = _round_up(F, 128)
    Hp = _round_up(H, 128)

    A_p = jnp.zeros((Np, Np), jnp.float32).at[:N, :N].set(A.astype(jnp.float32))
    x_p = jnp.zeros((Np, Fp), jnp.float32).at[:N, :F].set(x.astype(jnp.float32))
    W_p = (jnp.zeros((K + 1, Fp, Hp), jnp.float32)
           .at[:, :F, :H].set(W.astype(jnp.float32))
           .reshape((K + 1) * Fp, Hp)
           .astype(jnp.bfloat16))
    b_p = jnp.zeros((1, Hp), jnp.float32).at[:, :H].set(
        bias.astype(jnp.float32).reshape(1, H))

    kernel = functools.partial(_smconv_kernel, K=K, normalize=normalize, Fp=Fp)
    out = pl.pallas_call(
        kernel,
        out_shape=jax.ShapeDtypeStruct((Np, Hp), jnp.float32),
        in_specs=[
            _full_spec((Np, Np)),
            _full_spec((Np, Fp)),
            _full_spec(((K + 1) * Fp, Hp)),
            _full_spec((1, Hp)),
        ],
        out_specs=_full_spec((Np, Hp)),
        scratch_shapes=[pltpu.VMEM((Np, (K + 1) * Fp), jnp.bfloat16)],
        compiler_params=pltpu.CompilerParams(vmem_limit_bytes=32 * 1024 * 1024),
    )(A_p, x_p, W_p, b_p)
    return out[:N, :H]


def build_dense_adj(edge_index, edge_weight, num_nodes):
    """Dense operator matching PyG propagate with aggr='add':
    out[i] = sum over edges e with dst(e)=i of w_e * x[src(e)]  =>  A[dst, src] += w."""
    row, col = edge_index[0], edge_index[1]
    if edge_weight is None:
        edge_weight = jnp.ones(row.shape[0], dtype=jnp.float32)
    A = jnp.zeros((num_nodes, num_nodes), dtype=jnp.float32)
    A = A.at[col, row].add(edge_weight)
    return A


def lower_sclayer_forward(x, lower_index, lower_values, params, *, K, normalize,
                          sum_components=False):
    """Mirrors Lower_SCLayer.forward: only z_low is computed (z_up = z_har = 0)."""
    N = x.shape[0]
    A = build_dense_adj(lower_index, lower_values, N)
    z_low = smconv_pallas(A, x, params["W"], params["bias"], K=K, normalize=normalize)
    if sum_components:
        return z_low
    return {"z_low": z_low, "z_up": 0, "z_har": 0}


def _reference_smconv(A, x, W, bias, K, normalize):
    A = A.astype(jnp.float32)
    x = x.astype(jnp.float32)
    if normalize:
        deg = A.sum(axis=1)
        dis = jnp.where(deg > 0, deg ** -0.5, 0.0)
        A = dis[:, None] * A * dis[None, :]
    out = x @ W[0]
    xk = x
    for k in range(1, K + 1):
        xk = A @ xk
        out = out + xk @ W[k]
    return out + bias


if __name__ == "__main__":
    # Small, deterministic problem: N simplices, F input channels, H hidden channels.
    N, F, H, K, E = 16, 8, 32, 3, 40
    normalize = True

    key = jax.random.PRNGKey(0)
    kx, ke, kw, kwg, kb = jax.random.split(key, 5)

    x = jax.random.normal(kx, (N, F), dtype=jnp.float32)
    lower_index = jax.random.randint(ke, (2, E), 0, N, dtype=jnp.int32)
    lower_values = jax.random.uniform(kwg, (E,), dtype=jnp.float32,
                                      minval=0.5, maxval=1.5)

    # SMConv parameters: K+1 bias-free Linear(F, H) weights + one output bias.
    params = {
        "W": 0.1 * jax.random.normal(kw, (K + 1, F, H), dtype=jnp.float32),
        "bias": 0.1 * jax.random.normal(kb, (1, H), dtype=jnp.float32),
    }

    out = lower_sclayer_forward(x, lower_index, lower_values, params,
                                K=K, normalize=normalize)
    z_low = jax.block_until_ready(out["z_low"])

    # Pure-JAX f32 reference check of the SMConv math (kernel uses bf16 MXU
    # inputs with f32 accumulation, hence the looser tolerance).
    A = build_dense_adj(lower_index, lower_values, N)
    ref = _reference_smconv(A, x, params["W"], params["bias"], K, normalize)
    assert z_low.shape == (N, H)
    assert jnp.allclose(z_low, ref, atol=5e-2, rtol=5e-2), "mismatch vs reference"
    assert out["z_up"] == 0 and out["z_har"] == 0

    print("KERNEL_OK")
</pallas_src>

<mosaic_0001>
module attributes {stable_mosaic.version = 11 : i64} {
  func.func @_smconv_kernel(%arg0: memref<16x16xf32, #tpu.memory_space<vmem>>, %arg1: memref<16x128xf32, #tpu.memory_space<vmem>>, %arg2: memref<512x128xbf16, #tpu.memory_space<vmem>>, %arg3: memref<1x128xf32, #tpu.memory_space<vmem>>, %arg4: memref<16x128xf32, #tpu.memory_space<vmem>>, %arg5: memref<16x512xbf16, #tpu.memory_space<vmem>>) attributes {dimension_semantics = [], scalar_prefetch = 0 : i64, scratch_operands = 1 : i64, tpu.core_type = #tpu.core_type<tc>} {
    %c0 = arith.constant 0 : index
    %c0_0 = arith.constant 0 : index
    %0 = vector.load %arg0[%c0, %c0_0] : memref<16x16xf32, #tpu.memory_space<vmem>>, vector<16x16xf32>
    %c0_1 = arith.constant 0 : index
    %c0_2 = arith.constant 0 : index
    %1 = vector.load %arg1[%c0_1, %c0_2] : memref<16x128xf32, #tpu.memory_space<vmem>>, vector<16x128xf32>
    %cst = arith.constant dense<0.000000e+00> : vector<16xf32>
    %2 = vector.multi_reduction <add>, %0, %cst [1] : vector<16x16xf32> to vector<16xf32>
    %3 = vector.shape_cast %2 : vector<16xf32> to vector<16x1xf32>
    %cst_3 = arith.constant 0.000000e+00 : f32
    %4 = vector.broadcast %cst_3 : f32 to vector<16x1xf32>
    %5 = arith.cmpf ogt, %3, %4 : vector<16x1xf32>
    %6 = math.rsqrt %3 : vector<16x1xf32>
    %cst_4 = arith.constant 0.000000e+00 : f32
    %7 = vector.broadcast %cst_4 : f32 to vector<16x1xf32>
    %8 = arith.select %5, %6, %7 : vector<16x1xi1>, vector<16x1xf32>
    %9 = vector.shape_cast %8 : vector<16x1xf32> to vector<16x1xf32>
    %10 = vector.broadcast %9 : vector<16x1xf32> to vector<16x128xf32>
    %11 = arith.truncf %0 : vector<16x16xf32> to vector<16x16xbf16>
    %12 = arith.truncf %1 : vector<16x128xf32> to vector<16x128xbf16>
    %c0_5 = arith.constant 0 : index
    %c0_6 = arith.constant 0 : index
    %13 = vector.load %arg5[%c0_5, %c0_6] : memref<16x512xbf16, #tpu.memory_space<vmem>>, vector<16x128xbf16>
    tpu.vector_store %arg5[%c0_5, %c0_6], %12 {strides = array<i32>} : memref<16x512xbf16, #tpu.memory_space<vmem>>, vector<16x128xbf16>,
    %14 = arith.mulf %10, %1 : vector<16x128xf32>
    %15 = arith.truncf %14 : vector<16x128xf32> to vector<16x128xbf16>
    %cst_7 = arith.constant dense<0.000000e+00> : vector<16x128xf32>
    %16 = tpu.matmul %11, %15, %cst_7 {dimension_numbers = #tpu.dot_dimension_numbers<[1], [0], [0], [1], [0, 0, 1, 1], [], []>} : vector<16x16xbf16>, vector<16x128xbf16>, vector<16x128xf32> -> vector<16x128xf32>
    %17 = arith.mulf %10, %16 : vector<16x128xf32>
    %18 = arith.truncf %17 : vector<16x128xf32> to vector<16x128xbf16>
    %c0_8 = arith.constant 0 : index
    %c128 = arith.constant 128 : index
    %19 = vector.load %arg5[%c0_8, %c128] : memref<16x512xbf16, #tpu.memory_space<vmem>>, vector<16x128xbf16>
    tpu.vector_store %arg5[%c0_8, %c128], %18 {strides = array<i32>} : memref<16x512xbf16, #tpu.memory_space<vmem>>, vector<16x128xbf16>,
    %20 = arith.mulf %10, %17 : vector<16x128xf32>
    %21 = arith.truncf %20 : vector<16x128xf32> to vector<16x128xbf16>
    %cst_9 = arith.constant dense<0.000000e+00> : vector<16x128xf32>
    %22 = tpu.matmul %11, %21, %cst_9 {dimension_numbers = #tpu.dot_dimension_numbers<[1], [0], [0], [1], [0, 0, 1, 1], [], []>} : vector<16x16xbf16>, vector<16x128xbf16>, vector<16x128xf32> -> vector<16x128xf32>
    %23 = arith.mulf %10, %22 : vector<16x128xf32>
    %24 = arith.truncf %23 : vector<16x128xf32> to vector<16x128xbf16>
    %c0_10 = arith.constant 0 : index
    %c256 = arith.constant 256 : index
    %25 = vector.load %arg5[%c0_10, %c256] : memref<16x512xbf16, #tpu.memory_space<vmem>>, vector<16x128xbf16>
    tpu.vector_store %arg5[%c0_10, %c256], %24 {strides = array<i32>} : memref<16x512xbf16, #tpu.memory_space<vmem>>, vector<16x128xbf16>,
    %26 = arith.mulf %10, %23 : vector<16x128xf32>
    %27 = arith.truncf %26 : vector<16x128xf32> to vector<16x128xbf16>
    %cst_11 = arith.constant dense<0.000000e+00> : vector<16x128xf32>
    %28 = tpu.matmul %11, %27, %cst_11 {dimension_numbers = #tpu.dot_dimension_numbers<[1], [0], [0], [1], [0, 0, 1, 1], [], []>} : vector<16x16xbf16>, vector<16x128xbf16>, vector<16x128xf32> -> vector<16x128xf32>
    %29 = arith.mulf %10, %28 : vector<16x128xf32>
    %30 = arith.truncf %29 : vector<16x128xf32> to vector<16x128xbf16>
    %c0_12 = arith.constant 0 : index
    %c384 = arith.constant 384 : index
    %31 = vector.load %arg5[%c0_12, %c384] : memref<16x512xbf16, #tpu.memory_space<vmem>>, vector<16x128xbf16>
    tpu.vector_store %arg5[%c0_12, %c384], %30 {strides = array<i32>} : memref<16x512xbf16, #tpu.memory_space<vmem>>, vector<16x128xbf16>,
    %c0_13 = arith.constant 0 : index
    %c0_14 = arith.constant 0 : index
    %32 = vector.load %arg5[%c0_13, %c0_14] : memref<16x512xbf16, #tpu.memory_space<vmem>>, vector<16x512xbf16>
    %c0_15 = arith.constant 0 : index
    %c0_16 = arith.constant 0 : index
    %33 = vector.load %arg2[%c0_15, %c0_16] : memref<512x128xbf16, #tpu.memory_space<vmem>>, vector<512x128xbf16>
    %cst_17 = arith.constant dense<0.000000e+00> : vector<16x128xf32>
    %34 = tpu.matmul %32, %33, %cst_17 {dimension_numbers = #tpu.dot_dimension_numbers<[1], [0], [0], [1], [0, 0, 1, 1], [], []>} : vector<16x512xbf16>, vector<512x128xbf16>, vector<16x128xf32> -> vector<16x128xf32>
    %c0_18 = arith.constant 0 : index
    %c0_19 = arith.constant 0 : index
    %35 = vector.load %arg3[%c0_18, %c0_19] : memref<1x128xf32, #tpu.memory_space<vmem>>, vector<1x128xf32>
    %36 = vector.broadcast %35 : vector<1x128xf32> to vector<16x128xf32>
    %37 = arith.addf %34, %36 : vector<16x128xf32>
    %c0_20 = arith.constant 0 : index
    %c0_21 = arith.constant 0 : index
    %38 = vector.load %arg4[%c0_20, %c0_21] : memref<16x128xf32, #tpu.memory_space<vmem>>, vector<16x128xf32>
    tpu.vector_store %arg4[%c0_20, %c0_21], %37 {strides = array<i32>} : memref<16x128xf32, #tpu.memory_space<vmem>>, vector<16x128xf32>,
    return
  }
}

</mosaic_0001>

<llo_original>
// kernel: tpu_custom_call.1
$region0: #{tpu_custom_call.1}
  #allocation0 [shape = 'u32[]', space=smem, size = 0x4, offset = 0x4, fixed_abs, tag = 'smem constant byte address 0x4 - core index']
  #allocation1 [shape = 'u32[144,128]{1,0:T(1,128)}', space=vmem, size = 0x12000, scoped, tag = 'internal scratch']
  #allocation2 [shape = 'bf16[16,512]{1,0:T(16,128)(2,1)}', space=vmem, size = 0x4000, scoped, tag = 'scratch operand']
  %s0 = inlined_call_operand.hbm [shape: f32[16,16], index: 0, kind: input, shape index: {}]
  %s1 = inlined_call_operand.hbm [shape: f32[16,128], index: 1, kind: input, shape index: {}]
  %s2 = inlined_call_operand.hbm [shape: bf16[512,128], index: 2, kind: input, shape index: {}]
  %s3 = inlined_call_operand.vmem [shape: f32[1,128], index: 3, kind: input, shape index: {}]
  %s4 = inlined_call_operand.hbm [shape: f32[16,128], index: 4, kind: output, shape index: {}]
  %s5 = sld [smem:[#allocation0]]
  $region38: #{tpu_custom_call.1} parent=0
    _
  %s7 = ssub.s32 1, %s5
  %s8 = scalar_select 0, %s7, %s5
  $region1: #{tpu_custom_call.1} parent=0
    #allocation3 [shape = 'u8[8192]{0}', space=vmem, size = 0x2000, scoped, tag = 'input window, operand 0, single buffered']
    #allocation4 [shape = 's32[1]{0}', space=sflag, size = 0x4, scoped, tag = 'scoped memory for tpu_custom_call.1']
    #allocation5 [shape = 's32[1]{0}', space=sflag, size = 0x4, scoped, tag = 'scoped memory for tpu_custom_call.1']
    #allocation6 [shape = 'u8[8192]{0}', space=vmem, size = 0x2000, scoped, tag = 'input window, operand 1, single buffered']
    #allocation7 [shape = 's32[1]{0}', space=sflag, size = 0x4, scoped, tag = 'scoped memory for tpu_custom_call.1']
    #allocation8 [shape = 'u8[131072]{0}', space=vmem, size = 0x20000, scoped, tag = 'input window, operand 2, single buffered']
    #allocation9 [shape = 'u8[8192]{0}', space=vmem, size = 0x2000, scoped, tag = 'output window, operand 0, single buffered']
    %9 = vsyncpa [#allocation4], 0
    %10 = vsyncpa [#allocation7], 0
    %11 = vsyncpa [#allocation5], 0
    // Predicated region
    $region2: #{tpu_custom_call.1} parent=1 // pred_check
      _
    $region3: #{tpu_custom_call.1} parent=1 // pred_check_branch
      %13 = sbr.rel (0) target = $region5
    $region4: #{tpu_custom_call.1} parent=1 // pred_region
      %s15 = ssub.s32 256, 256
      %16 = vsyncadd [#allocation4], %s15
      %s17 = sshll.u32 [#allocation3], 4
      %s18 = int_to_ptr.vmem [resolvable:$true] %s17
      %23 = dma.hbm_to_vmem [thread:$0]  %s0, 256, %s18, [#allocation4], 128, 128, 8
    $region5: #{tpu_custom_call.1} parent=1 // pred_fallthru
      _
    // Predicated region
    $region6: #{tpu_custom_call.1} parent=1 // pred_check
      _
    $region7: #{tpu_custom_call.1} parent=1 // pred_check_branch
      %25 = sbr.rel (0) target = $region9
    $region8: #{tpu_custom_call.1} parent=1 // pred_region
      %s27 = ssub.s32 256, 256
      %28 = vsyncadd [#allocation7], %s27
      %s29 = sshll.u32 [#allocation6], 4
      %s30 = int_to_ptr.vmem [resolvable:$true] %s29
      %35 = dma.hbm_to_vmem [thread:$0]  %s1, 256, %s30, [#allocation7], 128, 128, 8
    $region9: #{tpu_custom_call.1} parent=1 // pred_fallthru
      _
    // Predicated region
    $region10: #{tpu_custom_call.1} parent=1 // pred_check
      _
    $region11: #{tpu_custom_call.1} parent=1 // pred_check_branch
      %37 = sbr.rel (0) target = $region13
    $region12: #{tpu_custom_call.1} parent=1 // pred_region
      %s39 = ssub.s32 4096, 4096
      %40 = vsyncadd [#allocation7], %s39
      %s41 = sshll.u32 [#allocation8], 4
      %s42 = int_to_ptr.vmem [resolvable:$true] %s41
      %47 = dma.hbm_to_vmem [thread:$0]  %s2, 4096, %s42, [#allocation7], 64, 64, 4
    $region13: #{tpu_custom_call.1} parent=1 // pred_fallthru
      _
    // Predicated region
    $region14: #{tpu_custom_call.1} parent=1 // pred_check
      _
    $region15: #{tpu_custom_call.1} parent=1 // pred_check_branch
      %49 = sbr.rel (0) target = $region17
    $region16: #{tpu_custom_call.1} parent=1 // pred_region
      _
    $region17: #{tpu_custom_call.1} parent=1 // pred_fallthru
      _
    // Predicated region
    $region18: #{tpu_custom_call.1} parent=1 // pred_check
      _
    $region19: #{tpu_custom_call.1} parent=1 // pred_check_branch
      %51 = sbr.rel (0) target = $region21
    $region20: #{tpu_custom_call.1} parent=1 // pred_region
      %52 = dma.done [#allocation4], 256
    $region21: #{tpu_custom_call.1} parent=1 // pred_fallthru
      _
    // Predicated region
    $region22: #{tpu_custom_call.1} parent=1 // pred_check
      _
    $region23: #{tpu_custom_call.1} parent=1 // pred_check_branch
      %54 = sbr.rel (0) target = $region25
    $region24: #{tpu_custom_call.1} parent=1 // pred_region
      %55 = dma.done [#allocation7], 256
    $region25: #{tpu_custom_call.1} parent=1 // pred_fallthru
      _
    // Predicated region
    $region26: #{tpu_custom_call.1} parent=1 // pred_check
      _
    $region27: #{tpu_custom_call.1} parent=1 // pred_check_branch
      %57 = sbr.rel (0) target = $region29
    $region28: #{tpu_custom_call.1} parent=1 // pred_region
      %58 = dma.done [#allocation7], 4096
    $region29: #{tpu_custom_call.1} parent=1 // pred_fallthru
      _
    %v60 = vld [vmem:[#allocation3] sm:$0xff]
    %v61 = vld [vmem:[#allocation3 + $0x8] sm:$0xff]
    %v62 = vld [vmem:[#allocation6] sm:$0xff]
    %v63 = vld [vmem:[#allocation6 + $0x8] sm:$0xff]
    %vm64 = vcmask 130048
    %v65 = vsel %vm64, %v60, 0.0
    %66 = vadd.xlane.f32.xlu0 %v65
    %v67 = vpop.xlane.xlu0 %66
    %v68 = vsel %vm64, %v61, 0.0
    %69 = vadd.xlane.f32.xlu0 %v68
    %v70 = vpop.xlane.xlu0 %69
    %vm71 = vcmp.gt.f32.partialorder %v67, 0.0
    %vm72 = vcmp.gt.f32.partialorder %v70, 0.0
    %v73 = vrsqrt.pop %v67
    %v74 = vrsqrt.pop %v70
    %v75 = vsel %vm71, %v73, 0.0
    %v76 = vsel %vm72, %v74, 0.0
    %v77 = vpack.c.bf16 %v61, %v60
    %v78 = vpack.c.bf16 %v63, %v62
    %79 = vst [vmem:[#allocation2] sm:$0xff] %v78
    %v80 = vmul.f32 %v75, %v62
    %v81 = vmul.f32 %v76, %v63
    %v82 = vpack.c.bf16 %v81, %v80
    %v84 = vsel %vm64, %v77, 0
    %86 = vmatprep.subr.bf16.mxu0 0
    %87 = vmatpush1.bf16.msra.mxu0 %v82
    %88 = vmatprep.subr.bf16.mxu0 0
    %89 = vmatpush1.bf16.msra.mxu0 0
    %90 = vmatprep.subr.bf16.mxu0 0
    %91 = vmatpush1.bf16.msra.mxu0 0
    %92 = vmatprep.subr.bf16.mxu0 0
    %93 = vmatpush1.bf16.msra.mxu0 0
    %94 = vmatprep.subr.bf16.mxu0 0
    %95 = vmatpush1.bf16.msra.mxu0 0
    %96 = vmatprep.subr.bf16.mxu0 0
    %97 = vmatpush1.bf16.msra.mxu0 0
    %98 = vmatprep.subr.bf16.mxu0 0
    %99 = vmatpush1.bf16.msra.mxu0 0
    %100 = vmatprep.subr.bf16.mxu0 0
    %101 = vmatpush1.bf16.msra.mxu0 0
    %102 = vmatprep.subr.bf16.mxu0 0
    %103 = vmatpush1.bf16.msra.mxu0 0
    %104 = vmatprep.subr.bf16.mxu0 0
    %105 = vmatpush1.bf16.msra.mxu0 0
    %106 = vmatprep.subr.bf16.mxu0 0
    %107 = vmatpush1.bf16.msra.mxu0 0
    %108 = vmatprep.subr.bf16.mxu0 0
    %109 = vmatpush1.bf16.msra.mxu0 0
    %110 = vmatprep.subr.bf16.mxu0 0
    %111 = vmatpush1.bf16.msra.mxu0 0
    %112 = vmatprep.subr.bf16.mxu0 0
    %113 = vmatpush1.bf16.msra.mxu0 0
    %114 = vmatprep.subr.bf16.mxu0 0
    %115 = vmatpush1.bf16.msra.mxu0 0
    %116 = vmatprep.subr.bf16.mxu0 0
    %117 = vmatpush1.bf16.msra.mxu0 0
    %118 = vmatprep.mubr.bf16.mxu0 0
    %119 = vmatmul.mubr.bf16.gmra.mrb[0].mxu0 %v84
    %v120 = vpop.f32.mrb[0].mxu0
    %v121 = vadd.f32 0.0, %v120
    %v122 = vpop.f32.mrb[0].mxu0
    %v123 = vpop.f32.mrb[0].mxu0
    %v124 = vadd.f32 0.0, %v123
    %v125 = vpop.f32.mrb[0].mxu0
    %126 = vdwg.mxu0
    %v127 = vmul.f32 %v75, %v121
    %v128 = vmul.f32 %v76, %v124
    %v129 = vpack.c.bf16 %v128, %v127
    %130 = vst [vmem:[#allocation2 + $0x8] sm:$0xff] %v129
    %v131 = vmul.f32 %v75, %v127
    %v132 = vmul.f32 %v76, %v128
    %v133 = vpack.c.bf16 %v132, %v131
    %134 = vmatprep.subr.bf16.mxu0 0
    %135 = vmatpush1.bf16.msra.mxu0 %v133
    %136 = vmatprep.subr.bf16.mxu0 0
    %137 = vmatpush1.bf16.msra.mxu0 0
    %138 = vmatprep.subr.bf16.mxu0 0
    %139 = vmatpush1.bf16.msra.mxu0 0
    %140 = vmatprep.subr.bf16.mxu0 0
    %141 = vmatpush1.bf16.msra.mxu0 0
    %142 = vmatprep.subr.bf16.mxu0 0
    %143 = vmatpush1.bf16.msra.mxu0 0
    %144 = vmatprep.subr.bf16.mxu0 0
    %145 = vmatpush1.bf16.msra.mxu0 0
    %146 = vmatprep.subr.bf16.mxu0 0
    %147 = vmatpush1.bf16.msra.mxu0 0
    %148 = vmatprep.subr.bf16.mxu0 0
    %149 = vmatpush1.bf16.msra.mxu0 0
    %150 = vmatprep.subr.bf16.mxu0 0
    %151 = vmatpush1.bf16.msra.mxu0 0
    %152 = vmatprep.subr.bf16.mxu0 0
    %153 = vmatpush1.bf16.msra.mxu0 0
    %154 = vmatprep.subr.bf16.mxu0 0
    %155 = vmatpush1.bf16.msra.mxu0 0
    %156 = vmatprep.subr.bf16.mxu0 0
    %157 = vmatpush1.bf16.msra.mxu0 0
    %158 = vmatprep.subr.bf16.mxu0 0
    %159 = vmatpush1.bf16.msra.mxu0 0
    %160 = vmatprep.subr.bf16.mxu0 0
    %161 = vmatpush1.bf16.msra.mxu0 0
    %162 = vmatprep.subr.bf16.mxu0 0
    %163 = vmatpush1.bf16.msra.mxu0 0
    %164 = vmatprep.subr.bf16.mxu0 0
    %165 = vmatpush1.bf16.msra.mxu0 0
    %166 = vmatprep.mubr.bf16.mxu0 0
    %167 = vmatmul.mubr.bf16.gmra.mrb[0].mxu0 %v84
    %v168 = vpop.f32.mrb[0].mxu0
    %v169 = vadd.f32 0.0, %v168
    %v170 = vpop.f32.mrb[0].mxu0
    %v171 = vpop.f32.mrb[0].mxu0
    %v172 = vadd.f32 0.0, %v171
    %v173 = vpop.f32.mrb[0].mxu0
    %174 = vdwg.mxu0
    %v175 = vmul.f32 %v75, %v169
    %v176 = vmul.f32 %v76, %v172
    %v177 = vpack.c.bf16 %v176, %v175
    %178 = vst [vmem:[#allocation2 + $0x10] sm:$0xff] %v177
    %v179 = vmul.f32 %v75, %v175
    %v180 = vmul.f32 %v76, %v176
    %v181 = vpack.c.bf16 %v180, %v179
    %182 = vmatprep.subr.bf16.mxu0 0
    %183 = vmatpush1.bf16.msra.mxu0 %v181
    %184 = vmatprep.subr.bf16.mxu0 0
    %185 = vmatpush1.bf16.msra.mxu0 0
    %186 = vmatprep.subr.bf16.mxu0 0
    %187 = vmatpush1.bf16.msra.mxu0 0
    %188 = vmatprep.subr.bf16.mxu0 0
    %189 = vmatpush1.bf16.msra.mxu0 0
    %190 = vmatprep.subr.bf16.mxu0 0
    %191 = vmatpush1.bf16.msra.mxu0 0
    %192 = vmatprep.subr.bf16.mxu0 0
    %193 = vmatpush1.bf16.msra.mxu0 0
    %194 = vmatprep.subr.bf16.mxu0 0
    %195 = vmatpush1.bf16.msra.mxu0 0
    %196 = vmatprep.subr.bf16.mxu0 0
    %197 = vmatpush1.bf16.msra.mxu0 0
    %198 = vmatprep.subr.bf16.mxu0 0
    %199 = vmatpush1.bf16.msra.mxu0 0
    %200 = vmatprep.subr.bf16.mxu0 0
    %201 = vmatpush1.bf16.msra.mxu0 0
    %202 = vmatprep.subr.bf16.mxu0 0
    %203 = vmatpush1.bf16.msra.mxu0 0
    %204 = vmatprep.subr.bf16.mxu0 0
    %205 = vmatpush1.bf16.msra.mxu0 0
    %206 = vmatprep.subr.bf16.mxu0 0
    %207 = vmatpush1.bf16.msra.mxu0 0
    %208 = vmatprep.subr.bf16.mxu0 0
    %209 = vmatpush1.bf16.msra.mxu0 0
    %210 = vmatprep.subr.bf16.mxu0 0
    %211 = vmatpush1.bf16.msra.mxu0 0
    %212 = vmatprep.subr.bf16.mxu0 0
    %213 = vmatpush1.bf16.msra.mxu0 0
    %214 = vmatprep.mubr.bf16.mxu0 0
    %215 = vmatmul.mubr.bf16.gmra.mrb[0].mxu0 %v84
    %v216 = vpop.f32.mrb[0].mxu0
    %v217 = vadd.f32 0.0, %v216
    %v218 = vpop.f32.mrb[0].mxu0
    %v219 = vpop.f32.mrb[0].mxu0
    %v220 = vadd.f32 0.0, %v219
    %v221 = vpop.f32.mrb[0].mxu0
    %222 = vdwg.mxu0
    %v223 = vmul.f32 %v75, %v217
    %v224 = vmul.f32 %v76, %v220
    %v225 = vpack.c.bf16 %v224, %v223
    %226 = vst [vmem:[#allocation2 + $0x18] sm:$0xff] %v225
    %v227 = vld [vmem:[#allocation2] sm:$0xff]
    %v228 = vld [vmem:[#allocation2 + $0x8] sm:$0xff]
    %v229 = vld [vmem:[#allocation2 + $0x10] sm:$0xff]
    %v230 = vld [vmem:[#allocation2 + $0x18] sm:$0xff]
    %v231 = vld [vmem:[#allocation8] sm:$0xf]
    %v232 = vld [vmem:[#allocation8 + $0x4] sm:$0xf]
    %v233 = vld [vmem:[#allocation8 + $0x8] sm:$0xf]
    %v234 = vld [vmem:[#allocation8 + $0xc] sm:$0xf]
    %v235 = vld [vmem:[#allocation8 + $0x10] sm:$0xf]
    %v236 = vld [vmem:[#allocation8 + $0x14] sm:$0xf]
    %v237 = vld [vmem:[#allocation8 + $0x18] sm:$0xf]
    %v238 = vld [vmem:[#allocation8 + $0x1c] sm:$0xf]
    %v239 = vld [vmem:[#allocation8 + $0x20] sm:$0xf]
    %v240 = vld [vmem:[#allocation8 + $0x24] sm:$0xf]
    %v241 = vld [vmem:[#allocation8 + $0x28] sm:$0xf]
    %v242 = vld [vmem:[#allocation8 + $0x2c] sm:$0xf]
    %v243 = vld [vmem:[#allocation8 + $0x30] sm:$0xf]
    %v244 = vld [vmem:[#allocation8 + $0x34] sm:$0xf]
    %v245 = vld [vmem:[#allocation8 + $0x38] sm:$0xf]
    %v246 = vld [vmem:[#allocation8 + $0x3c] sm:$0xf]
    %v247 = vld [vmem:[#allocation8 + $0x40] sm:$0xf]
    %v248 = vld [vmem:[#allocation8 + $0x44] sm:$0xf]
    %v249 = vld [vmem:[#allocation8 + $0x48] sm:$0xf]
    %v250 = vld [vmem:[#allocation8 + $0x4c] sm:$0xf]
    %v251 = vld [vmem:[#allocation8 + $0x50] sm:$0xf]
    %v252 = vld [vmem:[#allocation8 + $0x54] sm:$0xf]
    %v253 = vld [vmem:[#allocation8 + $0x58] sm:$0xf]
    %v254 = vld [vmem:[#allocation8 + $0x5c] sm:$0xf]
    %v255 = vld [vmem:[#allocation8 + $0x60] sm:$0xf]
    %v256 = vld [vmem:[#allocation8 + $0x64] sm:$0xf]
    %v257 = vld [vmem:[#allocation8 + $0x68] sm:$0xf]
    %v258 = vld [vmem:[#allocation8 + $0x6c] sm:$0xf]
    %v259 = vld [vmem:[#allocation8 + $0x70] sm:$0xf]
    %v260 = vld [vmem:[#allocation8 + $0x74] sm:$0xf]
    %v261 = vld [vmem:[#allocation8 + $0x78] sm:$0xf]
    %v262 = vld [vmem:[#allocation8 + $0x7c] sm:$0xf]
    %v263 = vld [vmem:[#allocation8 + $0x80] sm:$0xf]
    %v264 = vld [vmem:[#allocation8 + $0x84] sm:$0xf]
    %v265 = vld [vmem:[#allocation8 + $0x88] sm:$0xf]
    %v266 = vld [vmem:[#allocation8 + $0x8c] sm:$0xf]
    %v267 = vld [vmem:[#allocation8 + $0x90] sm:$0xf]
    %v268 = vld [vmem:[#allocation8 + $0x94] sm:$0xf]
    %v269 = vld [vmem:[#allocation8 + $0x98] sm:$0xf]
    %v270 = vld [vmem:[#allocation8 + $0x9c] sm:$0xf]
    %v271 = vld [vmem:[#allocation8 + $0xa0] sm:$0xf]
    %v272 = vld [vmem:[#allocation8 + $0xa4] sm:$0xf]
    %v273 = vld [vmem:[#allocation8 + $0xa8] sm:$0xf]
    %v274 = vld [vmem:[#allocation8 + $0xac] sm:$0xf]
    %v275 = vld [vmem:[#allocation8 + $0xb0] sm:$0xf]
    %v276 = vld [vmem:[#allocation8 + $0xb4] sm:$0xf]
    %v277 = vld [vmem:[#allocation8 + $0xb8] sm:$0xf]
    %v278 = vld [vmem:[#allocation8 + $0xbc] sm:$0xf]
    %v279 = vld [vmem:[#allocation8 + $0xc0] sm:$0xf]
    %v280 = vld [vmem:[#allocation8 + $0xc4] sm:$0xf]
    %v281 = vld [vmem:[#allocation8 + $0xc8] sm:$0xf]
    %v282 = vld [vmem:[#allocation8 + $0xcc] sm:$0xf]
    %v283 = vld [vmem:[#allocation8 + $0xd0] sm:$0xf]
    %v284 = vld [vmem:[#allocation8 + $0xd4] sm:$0xf]
    %v285 = vld [vmem:[#allocation8 + $0xd8] sm:$0xf]
    %v286 = vld [vmem:[#allocation8 + $0xdc] sm:$0xf]
    %v287 = vld [vmem:[#allocation8 + $0xe0] sm:$0xf]
    %v288 = vld [vmem:[#allocation8 + $0xe4] sm:$0xf]
    %v289 = vld [vmem:[#allocation8 + $0xe8] sm:$0xf]
    %v290 = vld [vmem:[#allocation8 + $0xec] sm:$0xf]
    %v291 = vld [vmem:[#allocation8 + $0xf0] sm:$0xf]
    %v292 = vld [vmem:[#allocation8 + $0xf4] sm:$0xf]
    %v293 = vld [vmem:[#allocation8 + $0xf8] sm:$0xf]
    %v294 = vld [vmem:[#allocation8 + $0xfc] sm:$0xf]
    %v295 = vld [vmem:[%s3] sm:$0x1]
    %v297 = vlaneseq
    %v298 = vshrl.u32 %v297, 7
    %v299 = vsub.s32 0, %v298
    %v300 = vrot.slane %v295, %v299
    %v366 = vunpack.c.l.b16 %v231
    %v367 = vunpack.c.l.b16 %v232
    %v368 = vunpack.c.l.b16 %v233
    %v369 = vunpack.c.l.b16 %v234
    %v370 = vunpack.c.l.b16 %v235
    %v371 = vunpack.c.l.b16 %v236
    %v372 = vunpack.c.l.b16 %v237
    %v373 = vunpack.c.l.b16 %v238
    %v374 = vunpack.c.l.b16 %v239
    %v375 = vunpack.c.l.b16 %v240
    %v376 = vunpack.c.l.b16 %v241
    %v377 = vunpack.c.l.b16 %v242
    %v378 = vunpack.c.l.b16 %v243
    %v379 = vunpack.c.l.b16 %v244
    %v380 = vunpack.c.l.b16 %v245
    %v381 = vunpack.c.l.b16 %v246
    %v382 = vunpack.c.l.b16 %v247
    %v383 = vunpack.c.l.b16 %v248
    %v384 = vunpack.c.l.b16 %v249
    %v385 = vunpack.c.l.b16 %v250
    %v386 = vunpack.c.l.b16 %v251
    %v387 = vunpack.c.l.b16 %v252
    %v388 = vunpack.c.l.b16 %v253
    %v389 = vunpack.c.l.b16 %v254
    %v390 = vunpack.c.l.b16 %v255
    %v391 = vunpack.c.l.b16 %v256
    %v392 = vunpack.c.l.b16 %v257
    %v393 = vunpack.c.l.b16 %v258
    %v394 = vunpack.c.l.b16 %v259
    %v395 = vunpack.c.l.b16 %v260
    %v396 = vunpack.c.l.b16 %v261
    %v397 = vunpack.c.l.b16 %v262
    %v398 = vunpack.c.l.b16 %v263
    %v399 = vunpack.c.l.b16 %v264
    %v400 = vunpack.c.l.b16 %v265
    %v401 = vunpack.c.l.b16 %v266
    %v402 = vunpack.c.l.b16 %v267
    %v403 = vunpack.c.l.b16 %v268
    %v404 = vunpack.c.l.b16 %v269
    %v405 = vunpack.c.l.b16 %v270
    %v406 = vunpack.c.l.b16 %v271
    %v407 = vunpack.c.l.b16 %v272
    %v408 = vunpack.c.l.b16 %v273
    %v409 = vunpack.c.l.b16 %v274
    %v410 = vunpack.c.l.b16 %v275
    %v411 = vunpack.c.l.b16 %v276
    %v412 = vunpack.c.l.b16 %v277
    %v413 = vunpack.c.l.b16 %v278
    %v414 = vunpack.c.l.b16 %v279
    %v415 = vunpack.c.l.b16 %v280
    %v416 = vunpack.c.l.b16 %v281
    %v417 = vunpack.c.l.b16 %v282
    %v418 = vunpack.c.l.b16 %v283
    %v419 = vunpack.c.l.b16 %v284
    %v420 = vunpack.c.l.b16 %v285
    %v421 = vunpack.c.l.b16 %v286
    %v422 = vunpack.c.l.b16 %v287
    %v423 = vunpack.c.l.b16 %v288
    %v424 = vunpack.c.l.b16 %v289
    %v425 = vunpack.c.l.b16 %v290
    %v426 = vunpack.c.l.b16 %v291
    %v427 = vunpack.c.l.b16 %v292
    %v428 = vunpack.c.l.b16 %v293
    %v429 = vunpack.c.l.b16 %v294
    %v430 = vpack.c.b16 %v367, %v366
    %v431 = vpack.c.b16 %v369, %v368
    %v432 = vpack.c.b16 %v371, %v370
    %v433 = vpack.c.b16 %v373, %v372
    %v434 = vpack.c.b16 %v375, %v374
    %v435 = vpack.c.b16 %v377, %v376
    %v436 = vpack.c.b16 %v379, %v378
    %v437 = vpack.c.b16 %v381, %v380
    %v438 = vpack.c.b16 %v383, %v382
    %v439 = vpack.c.b16 %v385, %v384
    %v440 = vpack.c.b16 %v387, %v386
    %v441 = vpack.c.b16 %v389, %v388
    %v442 = vpack.c.b16 %v391, %v390
    %v443 = vpack.c.b16 %v393, %v392
    %v444 = vpack.c.b16 %v395, %v394
    %v445 = vpack.c.b16 %v397, %v396
    %v446 = vpack.c.b16 %v399, %v398
    %v447 = vpack.c.b16 %v401, %v400
    %v448 = vpack.c.b16 %v403, %v402
    %v449 = vpack.c.b16 %v405, %v404
    %v450 = vpack.c.b16 %v407, %v406
    %v451 = vpack.c.b16 %v409, %v408
    %v452 = vpack.c.b16 %v411, %v410
    %v453 = vpack.c.b16 %v413, %v412
    %v454 = vpack.c.b16 %v415, %v414
    %v455 = vpack.c.b16 %v417, %v416
    %v456 = vpack.c.b16 %v419, %v418
    %v457 = vpack.c.b16 %v421, %v420
    %v458 = vpack.c.b16 %v423, %v422
    %v459 = vpack.c.b16 %v425, %v424
    %v460 = vpack.c.b16 %v427, %v426
    %v461 = vpack.c.b16 %v429, %v428
    %494 = vmatprep.subr.bf16.mxu0 0
    %495 = vmatpush1.bf16.msra.mxu0 %v430
    %496 = vmatprep.subr.bf16.mxu0 0
    %497 = vmatpush1.bf16.msra.mxu0 %v431
    %498 = vmatprep.subr.bf16.mxu0 0
    %499 = vmatpush1.bf16.msra.mxu0 %v432
    %500 = vmatprep.subr.bf16.mxu0 0
    %501 = vmatpush1.bf16.msra.mxu0 %v433
    %502 = vmatprep.subr.bf16.mxu0 0
    %503 = vmatpush1.bf16.msra.mxu0 %v434
    %504 = vmatprep.subr.bf16.mxu0 0
    %505 = vmatpush1.bf16.msra.mxu0 %v435
    %506 = vmatprep.subr.bf16.mxu0 0
    %507 = vmatpush1.bf16.msra.mxu0 %v436
    %508 = vmatprep.subr.bf16.mxu0 0
    %509 = vmatpush1.bf16.msra.mxu0 %v437
    %510 = vmatprep.subr.bf16.mxu0 0
    %511 = vmatpush1.bf16.msra.mxu0 %v438
    %512 = vmatprep.subr.bf16.mxu0 0
    %513 = vmatpush1.bf16.msra.mxu0 %v439
    %514 = vmatprep.subr.bf16.mxu0 0
    %515 = vmatpush1.bf16.msra.mxu0 %v440
    %516 = vmatprep.subr.bf16.mxu0 0
    %517 = vmatpush1.bf16.msra.mxu0 %v441
    %518 = vmatprep.subr.bf16.mxu0 0
    %519 = vmatpush1.bf16.msra.mxu0 %v442
    %520 = vmatprep.subr.bf16.mxu0 0
    %521 = vmatpush1.bf16.msra.mxu0 %v443
    %522 = vmatprep.subr.bf16.mxu0 0
    %523 = vmatpush1.bf16.msra.mxu0 %v444
    %524 = vmatprep.subr.bf16.mxu0 0
    %525 = vmatpush1.bf16.msra.mxu0 %v445
    %526 = vmatprep.mubr.bf16.mxu0 %v228
    %527 = vmatmul.mubr.bf16.gmra.mrb[0].mxu0 %v227
    %v528 = vpop.f32.mrb[0].mxu0
    %v529 = vadd.f32 %v300, %v528
    %v530 = vpop.f32.mrb[0].mxu0
    %v531 = vpop.f32.mrb[0].mxu0
    %v532 = vadd.f32 %v300, %v531
    %v533 = vpop.f32.mrb[0].mxu0
    %534 = vdwg.mxu0
    %535 = vmatprep.subr.bf16.mxu0 0
    %536 = vmatpush1.bf16.msra.mxu0 %v446
    %537 = vmatprep.subr.bf16.mxu0 0
    %538 = vmatpush1.bf16.msra.mxu0 %v447
    %539 = vmatprep.subr.bf16.mxu0 0
    %540 = vmatpush1.bf16.msra.mxu0 %v448
    %541 = vmatprep.subr.bf16.mxu0 0
    %542 = vmatpush1.bf16.msra.mxu0 %v449
    %543 = vmatprep.subr.bf16.mxu0 0
    %544 = vmatpush1.bf16.msra.mxu0 %v450
    %545 = vmatprep.subr.bf16.mxu0 0
    %546 = vmatpush1.bf16.msra.mxu0 %v451
    %547 = vmatprep.subr.bf16.mxu0 0
    %548 = vmatpush1.bf16.msra.mxu0 %v452
    %549 = vmatprep.subr.bf16.mxu0 0
    %550 = vmatpush1.bf16.msra.mxu0 %v453
    %551 = vmatprep.subr.bf16.mxu0 0
    %552 = vmatpush1.bf16.msra.mxu0 %v454
    %553 = vmatprep.subr.bf16.mxu0 0
    %554 = vmatpush1.bf16.msra.mxu0 %v455
    %555 = vmatprep.subr.bf16.mxu0 0
    %556 = vmatpush1.bf16.msra.mxu0 %v456
    %557 = vmatprep.subr.bf16.mxu0 0
    %558 = vmatpush1.bf16.msra.mxu0 %v457
    %559 = vmatprep.subr.bf16.mxu0 0
    %560 = vmatpush1.bf16.msra.mxu0 %v458
    %561 = vmatprep.subr.bf16.mxu0 0
    %562 = vmatpush1.bf16.msra.mxu0 %v459
    %563 = vmatprep.subr.bf16.mxu0 0
    %564 = vmatpush1.bf16.msra.mxu0 %v460
    %565 = vmatprep.subr.bf16.mxu0 0
    %566 = vmatpush1.bf16.msra.mxu0 %v461
    %567 = vmatprep.mubr.bf16.mxu0 %v230
    %568 = vmatmul.mubr.bf16.gmra.mrb[0].mxu0 %v229
    %v569 = vpop.f32.mrb[0].mxu0
    %v570 = vadd.f32 %v529, %v569
    %v571 = vpop.f32.mrb[0].mxu0
    %v572 = vpop.f32.mrb[0].mxu0
    %v573 = vadd.f32 %v532, %v572
    %v574 = vpop.f32.mrb[0].mxu0
    %575 = vdwg.mxu0
    %576 = vst [vmem:[#allocation9] sm:$0xff] %v570
    %577 = vst [vmem:[#allocation9 + $0x8] sm:$0xff] %v573
    // Predicated region
    $region30: #{tpu_custom_call.1} parent=1 // pred_check
      _
    $region31: #{tpu_custom_call.1} parent=1 // pred_check_branch
      %579 = sbr.rel (0) target = $region33
    $region32: #{tpu_custom_call.1} parent=1 // pred_region
      %s581 = ssub.s32 256, 256
      %582 = vsyncadd [#allocation5], %s581
      %s583 = sshll.u32 [#allocation9], 4
      %s584 = int_to_ptr.vmem [resolvable:$true] %s583
      %589 = dma.vmem_to_hbm [thread:$0]  %s584, 256, %s4, [#allocation5], 128, 128, 8
    $region33: #{tpu_custom_call.1} parent=1 // pred_fallthru
      _
    // Predicated region
    $region34: #{tpu_custom_call.1} parent=1 // pred_check
      _
    $region35: #{tpu_custom_call.1} parent=1 // pred_check_branch
      %591 = sbr.rel (0) target = $region37
    $region36: #{tpu_custom_call.1} parent=1 // pred_region
      %592 = dma.done [#allocation5], 256
    $region37: #{tpu_custom_call.1} parent=1 // pred_fallthru
      _
    %593 = vsyncpa [#allocation4], 1
    %594 = vsyncpa [#allocation7], 1
    %595 = vsyncpa [#allocation5], 1

</llo_original>
